<compile_context>
chip_gen: v5e
topology: v5e:2x2
jax: 0.10.0
libtpu: 0.0.40
codegen_flags: <defaults>
</compile_context>

<pallas_src>
import math
from functools import partial

import jax
import jax.numpy as jnp
from jax.experimental import pallas as pl
from jax.experimental.pallas import tpu as pltpu


def _round_up(a, b):
    return (a + b - 1) // b * b


def _index_kernel_single_k(x_ref, w_ref, o_ref):
    """Whole-K contraction in one shot: one (tm, tn) output tile per grid point."""
    o_ref[...] = jnp.dot(
        x_ref[...], w_ref[...], preferred_element_type=jnp.float32
    ).astype(o_ref.dtype)


def _index_kernel_acc(x_ref, w_ref, o_ref, acc_ref):
    """One (tm, tn) output tile accumulated across the K grid axis.

    x_ref: (tm, tk) activations; w_ref: (tk, tn) pre-transposed weights;
    acc_ref: f32 VMEM accumulator resident across the K axis.
    """
    @pl.when(pl.program_id(2) == 0)
    def _init():
        acc_ref[...] = jnp.zeros_like(acc_ref)

    acc_ref[...] += jnp.dot(
        x_ref[...], w_ref[...], preferred_element_type=jnp.float32
    )

    @pl.when(pl.program_id(2) == pl.num_programs(2) - 1)
    def _store():
        o_ref[...] = acc_ref[...].astype(o_ref.dtype)


@partial(jax.jit, static_argnames=("tm", "tn", "tk", "compute_dtype",
                                   "vmem_limit_bytes"))
def index_layer_forward(x, weights, *, tm=256, tn=256, tk=512,
                        compute_dtype=None,
                        vmem_limit_bytes=64 * 1024 * 1024):
    """x: (..., ndims), weights: (nindices, ndims) -> (..., nindices) == x @ W.T.

    Tile defaults (tm=256, tn=256, tk=512) fit comfortably under the 64 MiB v7x
    VMEM (double-buffered operands + f32 accumulator); v6e/v5e can take larger
    tiles via the keyword args if desired.
    """
    # TODO(synk): at tiny production shapes (e.g. 8x32x16) a standalone pallas_call
    # is dominated by launch/DMA overhead -- fuse into a neighboring kernel or let
    # XLA handle it; this kernel pays off at larger batch / nindices / ndims.
    out_dtype = x.dtype
    lead_shape = x.shape[:-1]
    K = x.shape[-1]
    N, K_w = weights.shape
    assert K == K_w, "x and weights must share the ndims axis"

    x2 = x.reshape(-1, K)
    B = x2.shape[0]

    # One-time transpose in the wrapper: weights become (ndims, nindices) so the
    # kernel streams [tk, tn] tiles with nindices on the 128-lane axis.
    wt = weights.T

    if compute_dtype is not None:
        x2 = x2.astype(compute_dtype)
        wt = wt.astype(compute_dtype)

    # Clamp tiles to (padded) problem size; keep lane/sublane alignment.
    tm = min(tm, _round_up(B, 8))
    tn = min(tn, _round_up(N, 128))
    tk = min(tk, _round_up(K, 128))

    Mp = _round_up(B, tm)
    Kp = _round_up(K, tk)
    Np = _round_up(N, tn)

    # Zero-pad so every tile is full (K padding is mathematically a no-op; padded
    # rows / N columns are sliced off at the end).
    if (Mp, Kp) != (B, K):
        x2 = jnp.pad(x2, ((0, Mp - B), (0, Kp - K)))
    if (Kp, Np) != (K, N):
        wt = jnp.pad(wt, ((0, Kp - K), (0, Np - N)))

    gm, gn, gk = Mp // tm, Np // tn, Kp // tk

    cost = pl.CostEstimate(
        flops=2 * Mp * Np * Kp,
        transcendentals=0,
        bytes_accessed=(Mp * Kp * x2.dtype.itemsize
                        + Kp * Np * wt.dtype.itemsize
                        + Mp * Np * jnp.dtype(out_dtype).itemsize),
    )

    if gk == 1:
        # Fast path: whole contraction dim in one tile; no accumulator needed.
        kernel = _index_kernel_single_k
        grid = (gm, gn)
        in_specs = [
            pl.BlockSpec((tm, Kp), lambda i, j: (i, 0)),
            pl.BlockSpec((Kp, tn), lambda i, j: (0, j)),
        ]
        out_specs = pl.BlockSpec((tm, tn), lambda i, j: (i, j))
        scratch_shapes = []
        dim_sem = ("parallel", "parallel")
    else:
        kernel = _index_kernel_acc
        grid = (gm, gn, gk)
        # Deeper pipelining on the weight stream only when there are enough K
        # steps to benefit (small-batch regime is weight-streaming bound).
        w_spec_kwargs = {}
        if gk >= 3:
            w_spec_kwargs["pipeline_mode"] = pl.Buffered(3)
        in_specs = [
            pl.BlockSpec((tm, tk), lambda i, j, k: (i, k)),
            pl.BlockSpec((tk, tn), lambda i, j, k: (k, j), **w_spec_kwargs),
        ]
        out_specs = pl.BlockSpec((tm, tn), lambda i, j, k: (i, j))
        scratch_shapes = [pltpu.VMEM((tm, tn), jnp.float32)]
        dim_sem = ("parallel", "parallel", "arbitrary")

    out_padded = pl.pallas_call(
        kernel,
        out_shape=jax.ShapeDtypeStruct((Mp, Np), out_dtype),
        grid_spec=pltpu.PrefetchScalarGridSpec(
            num_scalar_prefetch=0,
            grid=grid,
            in_specs=in_specs,
            out_specs=out_specs,
            scratch_shapes=scratch_shapes,
        ),
        compiler_params=pltpu.CompilerParams(
            dimension_semantics=dim_sem,
            vmem_limit_bytes=vmem_limit_bytes,
        ),
        cost_estimate=cost,
    )(x2, wt)

    if (Mp, Np) != (B, N):
        out_padded = out_padded[:B, :N]
    return out_padded.reshape(lead_shape + (N,))


def kaiming_uniform_relu(key, nindices, ndims, dtype=jnp.float32):
    """Matches torch.nn.init.kaiming_uniform_(W, nonlinearity='relu') for a
    (nindices, ndims) weight: fan_in = ndims, gain = sqrt(2),
    bound = sqrt(3) * gain / sqrt(fan_in)."""
    gain = math.sqrt(2.0)
    bound = math.sqrt(3.0) * gain / math.sqrt(ndims)
    return jax.random.uniform(
        key, (nindices, ndims), dtype=dtype, minval=-bound, maxval=bound
    )


if __name__ == "__main__":
    # Small shapes consistent with the module: batch=8, ndims(hidden)=32, nindices=16
    B, NDIMS, NINDICES = 8, 32, 16

    key = jax.random.PRNGKey(0)
    kx, kw = jax.random.split(key)

    x = jax.random.normal(kx, (B, NDIMS), dtype=jnp.float32)
    W = kaiming_uniform_relu(kw, NINDICES, NDIMS)

    out = index_layer_forward(x, W)
    out = jax.block_until_ready(out)

    # Correctness check against plain-JAX reference of F.linear(x, W) = x @ W.T
    ref = x @ W.T
    assert out.shape == (B, NINDICES)
    assert jnp.allclose(out, ref, atol=1e-5, rtol=1e-5)

    print("KERNEL_OK")
</pallas_src>

<mosaic_0001>
module attributes {stable_mosaic.version = 11 : i64} {
  func.func @_index_kernel_single_k(%arg0: i32, %arg1: i32, %arg2: memref<8x128xf32, #tpu.memory_space<vmem>>, %arg3: memref<128x128xf32, #tpu.memory_space<vmem>>, %arg4: memref<8x128xf32, #tpu.memory_space<vmem>>) attributes {dimension_semantics = [#tpu.dimension_semantics<parallel>, #tpu.dimension_semantics<parallel>], iteration_bounds = array<i64: 1, 1>, scalar_prefetch = 0 : i64, scratch_operands = 0 : i64, tpu.core_type = #tpu.core_type<tc>, window_params = [{transform_indices = @transform_0, window_bounds = array<i64: 8, 128>}, {transform_indices = @transform_1, window_bounds = array<i64: 128, 128>}, {transform_indices = @transform_2, window_bounds = array<i64: 8, 128>}]} {
    %c0 = arith.constant 0 : index
    %c0_0 = arith.constant 0 : index
    %0 = vector.load %arg2[%c0, %c0_0] : memref<8x128xf32, #tpu.memory_space<vmem>>, vector<8x128xf32>
    %c0_1 = arith.constant 0 : index
    %c0_2 = arith.constant 0 : index
    %1 = vector.load %arg3[%c0_1, %c0_2] : memref<128x128xf32, #tpu.memory_space<vmem>>, vector<128x128xf32>
    %cst = arith.constant dense<0.000000e+00> : vector<8x128xf32>
    %2 = tpu.matmul %0, %1, %cst {dimension_numbers = #tpu.dot_dimension_numbers<[1], [0], [0], [1], [0, 0, 1, 1], [], []>} : vector<8x128xf32>, vector<128x128xf32>, vector<8x128xf32> -> vector<8x128xf32>
    %c0_3 = arith.constant 0 : index
    %c0_4 = arith.constant 0 : index
    %3 = vector.load %arg4[%c0_3, %c0_4] : memref<8x128xf32, #tpu.memory_space<vmem>>, vector<8x128xf32>
    tpu.vector_store %arg4[%c0_3, %c0_4], %2 {strides = array<i32>} : memref<8x128xf32, #tpu.memory_space<vmem>>, vector<8x128xf32>,
    return
  }
  func.func @transform_0(%arg0: i32, %arg1: i32) -> (i32, i32) {
    %c0_i32 = arith.constant 0 : i32
    %c0_i32_0 = arith.constant 0 : i32
    return %arg0, %c0_i32 : i32, i32
  }
  func.func @transform_1(%arg0: i32, %arg1: i32) -> (i32, i32) {
    %c0_i32 = arith.constant 0 : i32
    %c0_i32_0 = arith.constant 0 : i32
    return %c0_i32, %arg1 : i32, i32
  }
  func.func @transform_2(%arg0: i32, %arg1: i32) -> (i32, i32) {
    %c0_i32 = arith.constant 0 : i32
    return %arg0, %arg1 : i32, i32
  }
}

</mosaic_0001>

<llo_original>
// kernel: index_layer_forward.1
$region0: #{index_layer_forward.1}
  #allocation0 [shape = 'u32[]', space=smem, size = 0x4, offset = 0x4, fixed_abs, tag = 'smem constant byte address 0x4 - core index']
  #allocation1 [shape = 'u32[72,128]{1,0:T(1,128)}', space=vmem, size = 0x9000, scoped, tag = 'internal scratch']
  %s0 = inlined_call_operand.vmem [shape: f32[8,128], index: 0, kind: input, shape index: {}]
  %s1 = inlined_call_operand.vmem [shape: f32[128,128], index: 1, kind: input, shape index: {}]
  %s2 = inlined_call_operand.hbm [shape: f32[8,128], index: 2, kind: output, shape index: {}]
  %s3 = sld [smem:[#allocation0]]
  $region18: #{index_layer_forward.1} parent=0
    _
  %s5 = ssub.s32 1, %s3
  %s6 = scalar_select 0, %s5, %s3
  $region1: #{index_layer_forward.1} parent=0
    #allocation2 [shape = 'u8[4096]{0}', space=vmem, size = 0x1000, scoped, tag = 'output window, operand 0, single buffered']
    #allocation3 [shape = 's32[1]{0}', space=sflag, size = 0x4, scoped, tag = 'scoped memory for index_layer_forward.1']
    %7 = vsyncpa [#allocation3], 0
    // Predicated region
    $region2: #{index_layer_forward.1} parent=1 // pred_check
      _
    $region3: #{index_layer_forward.1} parent=1 // pred_check_branch
      %9 = sbr.rel (0) target = $region5
    $region4: #{index_layer_forward.1} parent=1 // pred_region
      _
    $region5: #{index_layer_forward.1} parent=1 // pred_fallthru
      _
    // Predicated region
    $region6: #{index_layer_forward.1} parent=1 // pred_check
      _
    $region7: #{index_layer_forward.1} parent=1 // pred_check_branch
      %11 = sbr.rel (0) target = $region9
    $region8: #{index_layer_forward.1} parent=1 // pred_region
      _
    $region9: #{index_layer_forward.1} parent=1 // pred_fallthru
      _
    %v12 = vld [vmem:[%s0] sm:$0xff]
    %v13 = vld [vmem:[%s1] sm:$0xff]
    %v14 = vld [vmem:[%s1 + $0x8] sm:$0xff]
    %v15 = vld [vmem:[%s1 + $0x10] sm:$0xff]
    %v16 = vld [vmem:[%s1 + $0x18] sm:$0xff]
    %v17 = vld [vmem:[%s1 + $0x20] sm:$0xff]
    %v18 = vld [vmem:[%s1 + $0x28] sm:$0xff]
    %v19 = vld [vmem:[%s1 + $0x30] sm:$0xff]
    %v20 = vld [vmem:[%s1 + $0x38] sm:$0xff]
    %v21 = vld [vmem:[%s1 + $0x40] sm:$0xff]
    %v22 = vld [vmem:[%s1 + $0x48] sm:$0xff]
    %v23 = vld [vmem:[%s1 + $0x50] sm:$0xff]
    %v24 = vld [vmem:[%s1 + $0x58] sm:$0xff]
    %v25 = vld [vmem:[%s1 + $0x60] sm:$0xff]
    %v26 = vld [vmem:[%s1 + $0x68] sm:$0xff]
    %v27 = vld [vmem:[%s1 + $0x70] sm:$0xff]
    %v28 = vld [vmem:[%s1 + $0x78] sm:$0xff]
    %29 = vmatpush.msra.mxu0 %v28
    %30 = vmatpush.msra.mxu0 %v27
    %31 = vmatpush.msra.mxu0 %v26
    %32 = vmatpush.msra.mxu0 %v25
    %33 = vmatpush.msra.mxu0 %v24
    %34 = vmatpush.msra.mxu0 %v23
    %35 = vmatpush.msra.mxu0 %v22
    %36 = vmatpush.msra.mxu0 %v21
    %37 = vmatpush.msra.mxu0 %v20
    %38 = vmatpush.msra.mxu0 %v19
    %39 = vmatpush.msra.mxu0 %v18
    %40 = vmatpush.msra.mxu0 %v17
    %41 = vmatpush.msra.mxu0 %v16
    %42 = vmatpush.msra.mxu0 %v15
    %43 = vmatpush.msra.mxu0 %v14
    %44 = vmatpush.msra.mxu0 %v13
    %45 = vmatmul.f32.gmra.mxu0 %v12
    %v46 = vpop.f32.mrf.mxu0
    %v47 = vadd.f32 0.0, %v46
    %48 = vdwg.mxu0
    %49 = vst [vmem:[#allocation2] sm:$0xff] %v47
    // Predicated region
    $region10: #{index_layer_forward.1} parent=1 // pred_check
      _
    $region11: #{index_layer_forward.1} parent=1 // pred_check_branch
      %51 = sbr.rel (0) target = $region13
    $region12: #{index_layer_forward.1} parent=1 // pred_region
      %53 = vsyncadd [#allocation3], 0
      %s55 = sshll.u32 [#allocation2], 4
      %s56 = int_to_ptr.vmem [resolvable:$true] %s55
      %s57 = sshll.u32 %s2, 4
      %s58 = int_to_ptr.hbm [resolvable:$true] %s57
      %60 = dma.vmem_to_hbm [thread:$0]  %s56, 128, %s58, [#allocation3]
    $region13: #{index_layer_forward.1} parent=1 // pred_fallthru
      _
    // Predicated region
    $region14: #{index_layer_forward.1} parent=1 // pred_check
      _
    $region15: #{index_layer_forward.1} parent=1 // pred_check_branch
      %62 = sbr.rel (0) target = $region17
    $region16: #{index_layer_forward.1} parent=1 // pred_region
      %64 = dma.done [#allocation3], 128
    $region17: #{index_layer_forward.1} parent=1 // pred_fallthru
      _
    %65 = vsyncpa [#allocation3], 1

</llo_original>
